<compile_context>
chip_gen: v7x
topology: tpu7x:2x2x1
jax: 0.10.0
libtpu: 0.0.40
codegen_flags: <defaults>
</compile_context>

<pallas_src>
import jax
import jax.numpy as jnp
from jax.experimental import pallas as pl
from jax.experimental.pallas import tpu as pltpu


def _variance_fill_kernel(var_ref, out_ref):
    # var_ref : SMEM (1, 1) float32 -- the learnable `variance` scalar parameter
    # out_ref : VMEM (1, tile_n) float32 -- lane-dense slab of the broadcast output
    inv_s = jnp.exp(var_ref[0, 0] * 10.0)            # EUP transcendental, once per tile
    out_ref[...] = jnp.full(out_ref.shape, inv_s, dtype=out_ref.dtype)


def variance_network_forward(x, variance, *, tile_n=128):
    """x: [N, ...] (only len(x) is used); variance: scalar parameter. Returns [N, 1] f32."""
    assert tile_n % 128 == 0, "tile_n must be a multiple of 128 for lane-dense stores"
    N = x.shape[0]
    n_tiles = pl.cdiv(N, tile_n)
    n_pad = n_tiles * tile_n

    var_arr = jnp.reshape(jnp.asarray(variance, dtype=jnp.float32), (1, 1))

    out_flat = pl.pallas_call(
        _variance_fill_kernel,
        out_shape=jax.ShapeDtypeStruct((1, n_pad), jnp.float32),
        grid=(n_tiles,),
        in_specs=[
            # whole (1,1) scalar parameter resident in SMEM, no per-step DMA
            pl.BlockSpec(memory_space=pltpu.MemorySpace.SMEM),
        ],
        out_specs=pl.BlockSpec((1, tile_n), lambda i: (0, i)),
        compiler_params=pltpu.CompilerParams(
            dimension_semantics=("parallel",)),
    )(var_arr)

    # back to the PyTorch layout [N, 1] (drop padding, column-vector view)
    return out_flat[0, :N].reshape(N, 1)


# TODO(synk): only the forward pass is implemented; the nn.Parameter update / autograd
#             backward of `variance` is left to the surrounding JAX training code.


if __name__ == "__main__":
    key = jax.random.PRNGKey(0)
    kx, kv = jax.random.split(key)

    N = 256                                     # -> 2 parallel grid steps at tile_n=128
    x = jax.random.uniform(kx, (N, 3), dtype=jnp.float32)      # point batch (values unused)
    init_val = 0.3
    variance = jnp.asarray(init_val, dtype=jnp.float32)        # the learnable scalar

    out = variance_network_forward(x, variance)
    out = jax.block_until_ready(out)

    ref = jnp.ones((N, 1), dtype=jnp.float32) * jnp.exp(variance * 10.0)

    assert out.shape == (N, 1), out.shape
    assert bool(jnp.allclose(out, ref, rtol=1e-6, atol=0.0)), "mismatch vs reference"
    print("KERNEL_OK")
</pallas_src>

<mosaic_0001>
module attributes {stable_mosaic.version = 11 : i64} {
  func.func @_variance_fill_kernel(%arg0: i32, %arg1: memref<1x1xf32, #tpu.memory_space<smem>>, %arg2: memref<1x128xf32, #tpu.memory_space<vmem>>) attributes {dimension_semantics = [#tpu.dimension_semantics<parallel>], iteration_bounds = array<i64: 2>, scalar_prefetch = 0 : i64, scratch_operands = 0 : i64, tpu.core_type = #tpu.core_type<tc>, window_params = [{transform_indices = @transform_0, window_bounds = array<i64: 1, 1>}, {transform_indices = @transform_1, window_bounds = array<i64: 1, 128>}]} {
    %c0 = arith.constant 0 : index
    %c0_0 = arith.constant 0 : index
    %0 = memref.load %arg1[%c0, %c0_0] : memref<1x1xf32, #tpu.memory_space<smem>>
    %cst = arith.constant 1.000000e+01 : f32
    %1 = arith.mulf %0, %cst : f32
    %2 = math.exp %1 : f32
    %3 = vector.broadcast %2 : f32 to vector<1x128xf32>
    %c0_1 = arith.constant 0 : index
    %c0_2 = arith.constant 0 : index
    %4 = vector.load %arg2[%c0_1, %c0_2] : memref<1x128xf32, #tpu.memory_space<vmem>>, vector<1x128xf32>
    tpu.vector_store %arg2[%c0_1, %c0_2], %3 {strides = array<i32>} : memref<1x128xf32, #tpu.memory_space<vmem>>, vector<1x128xf32>,
    return
  }
  func.func @transform_0(%arg0: i32) -> (i32, i32) {
    %c0_i32 = arith.constant 0 : i32
    %c0_i32_0 = arith.constant 0 : i32
    %c0_i32_1 = arith.constant 0 : i32
    return %c0_i32, %c0_i32_0 : i32, i32
  }
  func.func @transform_1(%arg0: i32) -> (i32, i32) {
    %c0_i32 = arith.constant 0 : i32
    %c0_i32_0 = arith.constant 0 : i32
    return %c0_i32, %arg0 : i32, i32
  }
}

</mosaic_0001>

<llo_original>
// kernel: tpu_custom_call.1
$region0: #{tpu_custom_call.1}
  #allocation0 [shape = 'u32[]', space=smem, size = 0x4, offset = 0x4, fixed_abs, tag = 'smem constant byte address 0x4 - core index']
  #allocation1 [shape = 'u32[144,128]{1,0:T(1,128)}', space=vmem, size = 0x12000, scoped, tag = 'internal scratch']
  #allocation2 [shape = 'f32[1,1]{1,0:T(1,128)S(6)}', space=smem, size = 0x200, scoped, tag = 'scoped memory for tpu_custom_call.1']
  %s0 = inlined_call_operand.<no memory space> [shape: f32[1,1], index: 0, kind: input, shape index: {}]
  %s1 = inlined_call_operand.hbm [shape: f32[1,256], index: 1, kind: output, shape index: {}]
  %s2 = sld [smem:[#allocation0]]
  $region37: #{tpu_custom_call.1} parent=0
    _
  %s4 = ssub.s32 1, %s2
  %s5 = scalar_select 0, %s4, %s2
  %6 = sst [smem:[#allocation2]] %s0
  $region1: #{tpu_custom_call.1} parent=0
    #allocation3 [shape = 'u8[1024]{0}', space=vmem, size = 0x400, scoped, tag = 'output window, operand 0']
    #allocation4 [shape = 's32[2]{0}', space=sflag, size = 0x8, scoped, tag = 'scoped memory for tpu_custom_call.1']
    %7 = vsyncpa [#allocation4], 0
    %s8 = scalar_lea.sflag [#allocation4], 1
    %9 = vsyncpa %s8, 0
    loop: start=0, step=1, limit=4
    $region2: #{tpu_custom_call.1} parent=1 // loop_pre_header
      _
    $region3: #{tpu_custom_call.1} parent=1 // loop_header
      %s11 = sphi 0, %s15
      %p12 = scmp.ge.s32.totalorder %s11, 4
      %s19 = sphi 0, %s19
      %s21 = sphi 0, %s19
      %s22 = sphi 0, %s21
      %s36 = sphi 0, %s22
      %s42 = sphi 0, %s44
      %s45 = sphi 0, %s42
      %s46 = sphi 0, %s45
      %s62 = sphi 0, %s46
    $region4: #{tpu_custom_call.1} parent=1 // loop_header_branch
      %14 = sbr.rel (%p12) target = $region8
    $region5: #{tpu_custom_call.1} parent=1 // loop_body
      %s16 = ssub.s32 %s11, 1
      %s17 = ssub.s32 %s11, 2
      %s18 = sadd.s32 %s11, 1
      %s20 = sadd.s32 %s19, 1
      %p23 = scmp.eq.s32.totalorder %s11, 1
      %p24 = scmp.ne.s32.totalorder %s19, %s21
      %p25 = scmp.eq.s32.totalorder %s11, 0
      %p26 = por %p24, %p25
      %p27 = scmp.ne.s32.totalorder %s19, %s21
      %p28 = scmp.eq.s32.totalorder %s16, 1
      %p29 = por %p27, %p28
      %p30 = scmp.ne.s32.totalorder %s21, %s22
      %p31 = scmp.eq.s32.totalorder %s16, 0
      %p32 = por %p30, %p31
      %p33 = scmp.ne.s32.totalorder %s21, %s22
      %p34 = scmp.eq.s32.totalorder %s17, 1
      %p35 = por %p33, %p34
      %p37 = scmp.ne.s32.totalorder %s22, %s36
      %p38 = scmp.eq.s32.totalorder %s17, 0
      %p39 = por %p37, %p38
      %s40 = ssub.s32 %s11, %s18
      %p41 = scmp.eq.s32.totalorder %s40, 0
      %s43 = sadd.s32 %s42, 1
      %s44 = scalar_select %p41, %s42, %s43
      %p47 = pneg %p41
      %p48 = scmp.eq.s32.totalorder %s11, 1
      %p49 = por %p47, %p48
      %p50 = scmp.ne.s32.totalorder %s42, %s45
      %p51 = scmp.eq.s32.totalorder %s11, 0
      %p52 = por %p50, %p51
      %p53 = scmp.ne.s32.totalorder %s42, %s45
      %p54 = scmp.eq.s32.totalorder %s16, 1
      %p55 = por %p53, %p54
      %p56 = scmp.ne.s32.totalorder %s45, %s46
      %p57 = scmp.eq.s32.totalorder %s16, 0
      %p58 = por %p56, %p57
      %p59 = scmp.ne.s32.totalorder %s45, %s46
      %p60 = scmp.eq.s32.totalorder %s17, 1
      %p61 = por %p59, %p60
      %p63 = scmp.ne.s32.totalorder %s46, %s62
      %p64 = scmp.eq.s32.totalorder %s17, 0
      %p65 = por %p63, %p64
      %p66 = scmp.le.s32.totalorder 1, %s11
      %p67 = scmp.lt.s32.totalorder %s11, 3
      %p68 = pnand %p66, %p67
      %p69 = pneg %p68
      // Predicated region
      $region9: #{tpu_custom_call.1} parent=5 // pred_check
        _
      $region10: #{tpu_custom_call.1} parent=5 // pred_check_branch
        %71 = sbr.rel (%p68) target = $region12
      $region11: #{tpu_custom_call.1} parent=5 // pred_region
        %s72 = ssub.s32 %s11, 1
        // Predicated region
        $region13: #{tpu_custom_call.1} parent=11 // pred_check
          %p73 = pneg %p32
        $region14: #{tpu_custom_call.1} parent=11 // pred_check_branch
          %75 = sbr.rel (%p73) target = $region16
        $region15: #{tpu_custom_call.1} parent=11 // pred_region
          _
        $region16: #{tpu_custom_call.1} parent=11 // pred_fallthru
          _
      $region12: #{tpu_custom_call.1} parent=5 // pred_fallthru
        _
      %p76 = scmp.lt.s32.totalorder %s11, 2
      // Predicated region
      $region17: #{tpu_custom_call.1} parent=5 // pred_check
        %p77 = pneg %p76
      $region18: #{tpu_custom_call.1} parent=5 // pred_check_branch
        %79 = sbr.rel (%p77) target = $region20
      $region19: #{tpu_custom_call.1} parent=5 // pred_region
        _
      $region20: #{tpu_custom_call.1} parent=5 // pred_fallthru
        _
      %p80 = scmp.le.s32.totalorder 1, %s11
      %p81 = scmp.lt.s32.totalorder %s11, 3
      %p82 = pnand %p80, %p81
      %p83 = pneg %p82
      // Predicated region
      $region21: #{tpu_custom_call.1} parent=5 // pred_check
        _
      $region22: #{tpu_custom_call.1} parent=5 // pred_check_branch
        %85 = sbr.rel (%p82) target = $region24
      $region23: #{tpu_custom_call.1} parent=5 // pred_region
        %s86 = ssub.s32 %s11, 1
        %p87 = pneg %p32
        %p88 = pneg %p29
        %p89 = pneg %p58
        %p90 = pneg %p55
        %s91 = sand.u32 %s45, 1
        %s92 = scalar_lea.sflag [#allocation4], %s91
        %s93 = sand.u32 %s45, 1
        %s94 = scalar_lea.vmem [#allocation3], %s93
        %s95 = sld [smem:[#allocation2]]
        %s96 = smul.f32 %s95, 10.0
        %v97 = vstv %s96
        %v98 = vmul.f32 %v97, 1.442695
        %v99 = vpow.pop %v98
        %s100 = vtos %v99
        %v101 = vstv %s100
        %102 = vst [vmem:[%s94] sm:$0x1] %v101
        %s103 = sand.u32 %s45, 1
        %s104 = scalar_lea.sflag [#allocation4], %s103
        %s105 = sand.u32 %s45, 1
        %s106 = scalar_lea.vmem [#allocation3], %s105
        // Predicated region
        $region25: #{tpu_custom_call.1} parent=23 // pred_check
          %p107 = pneg %p55
        $region26: #{tpu_custom_call.1} parent=23 // pred_check_branch
          %109 = sbr.rel (%p107) target = $region28
        $region27: #{tpu_custom_call.1} parent=23 // pred_region
          %s111 = ssub.s32 16, 16
          %112 = vsyncadd %s104, %s111
          %s113 = smul.addr %s16, 16
          %s114 = scalar_lea.hbm %s1, %s113
          %s116 = sshll.u32 %s106, 4
          %s117 = int_to_ptr.vmem [resolvable:$true] %s116
          %119 = dma.vmem_to_hbm [thread:$0]  %s117, 16, %s114, %s104
        $region28: #{tpu_custom_call.1} parent=23 // pred_fallthru
          _
      $region24: #{tpu_custom_call.1} parent=5 // pred_fallthru
        _
      %p120 = scmp.le.s32.totalorder 2, %s11
      // Predicated region
      $region29: #{tpu_custom_call.1} parent=5 // pred_check
        %p121 = pneg %p120
      $region30: #{tpu_custom_call.1} parent=5 // pred_check_branch
        %123 = sbr.rel (%p121) target = $region32
      $region31: #{tpu_custom_call.1} parent=5 // pred_region
        %s124 = ssub.s32 %s11, 2
        // Predicated region
        $region33: #{tpu_custom_call.1} parent=31 // pred_check
          %p125 = pneg %p61
        $region34: #{tpu_custom_call.1} parent=31 // pred_check_branch
          %127 = sbr.rel (%p125) target = $region36
        $region35: #{tpu_custom_call.1} parent=31 // pred_region
          %s128 = sand.u32 %s46, 1
          %s129 = scalar_lea.sflag [#allocation4], %s128
          %s130 = sand.u32 %s46, 1
          %s131 = scalar_lea.vmem [#allocation3], %s130
          %132 = dma.done %s129, 16
        $region36: #{tpu_custom_call.1} parent=31 // pred_fallthru
          _
      $region32: #{tpu_custom_call.1} parent=5 // pred_fallthru
        _
    $region6: #{tpu_custom_call.1} parent=1 // loop_footer
      %s15 = sadd.s32 1, %s11
    $region7: #{tpu_custom_call.1} parent=1 // loop_footer_branch
      %10 = sbr.rel target = $region3
    $region8: #{tpu_custom_call.1} parent=1 // loop_exit
      _
    %133 = vsyncpa [#allocation4], 1
    %s134 = scalar_lea.sflag [#allocation4], 1
    %135 = vsyncpa %s134, 1

</llo_original>
